<compile_context>
chip_gen: v7x
topology: tpu7x:2x2x1
jax: 0.10.0
libtpu: 0.0.40
codegen_flags: <defaults>
</compile_context>

<pallas_src>
import functools

import jax
import jax.numpy as jnp
from jax.experimental import pallas as pl
from jax.experimental.pallas import tpu as pltpu


# ----------------------------- kernels ------------------------------------ #

def _combine2_kernel(f1_ref, f2_ref, a_ref, oa_ref, ob_ref, *, c_in):
    """Channel combine for first=True: one read of A, two combined outputs.

    f1_ref, f2_ref : SMEM [C_out, C_in]  softmaxed filters
    a_ref          : VMEM [C_in, t, t]   bf16 adjacency tiles at (m, n)
    oa_ref, ob_ref : VMEM [t, t]         bf16 combined tiles (channel squeezed)
    """
    i = pl.program_id(0)
    a0 = a_ref[0].astype(jnp.float32)
    acc_a = f1_ref[i, 0] * a0
    acc_b = f2_ref[i, 0] * a0
    for j in range(1, c_in):
        aj = a_ref[j].astype(jnp.float32)
        acc_a = acc_a + f1_ref[i, j] * aj
        acc_b = acc_b + f2_ref[i, j] * aj
    oa_ref[...] = acc_a.astype(oa_ref.dtype)
    ob_ref[...] = acc_b.astype(ob_ref.dtype)


def _combine1_kernel(f1_ref, a_ref, oa_ref, *, c_in):
    """Channel combine for first=False (single filter)."""
    i = pl.program_id(0)
    acc = f1_ref[i, 0] * a_ref[0].astype(jnp.float32)
    for j in range(1, c_in):
        acc = acc + f1_ref[i, j] * a_ref[j].astype(jnp.float32)
    oa_ref[...] = acc.astype(oa_ref.dtype)


def _mm_kernel(a_ref, b_ref, h_ref):
    """Per-channel tiled matmul: H[i] = A[i] @ B[i].

    grid = (c_out, M_tiles, N_tiles, K_tiles); K is last and "arbitrary"; the
    f32 output block is resident across K and serves as the accumulator
    (no separate scratch).
    a_ref, b_ref : VMEM [t, t] bf16 (channel dim squeezed)
    h_ref        : VMEM [t, t] f32
    """
    k = pl.program_id(3)

    @pl.when(k == 0)
    def _():
        h_ref[...] = jnp.zeros_like(h_ref)

    h_ref[...] += jnp.dot(a_ref[...], b_ref[...],
                          preferred_element_type=jnp.float32)


# ----------------------------- helpers ------------------------------------ #

def _pick_tile(n):
    """Largest MXU-friendly square tile with modest padding overhead."""
    for t in (1024, 512, 256, 128):
        if n >= t and (pl.cdiv(n, t) * t - n) <= max(n // 4, 0):
            return t
    return 128


def _vmem_limit_bytes():
    """VMEM-aware scoped limit: headroom under the chip's physical VMEM."""
    try:
        cap = pltpu.get_tpu_info().vmem_capacity_bytes
    except Exception:  # pragma: no cover - conservative fallback (v7x-sized)
        cap = 64 * 1024 * 1024
    return int(min(cap - 8 * 1024 * 1024, 110 * 1024 * 1024))


def _pad_nn(x, n_pad, dtype=jnp.bfloat16):
    """Cast + zero-pad the last two (node) dims to n_pad (lane-dense)."""
    x = x.astype(dtype)
    n = x.shape[-1]
    if n == n_pad:
        return x
    pads = [(0, 0)] * (x.ndim - 2) + [(0, n_pad - n), (0, n_pad - n)]
    return jnp.pad(x, pads)


def _combine(A_bf, filters, t):
    """Precombine: out[f][o] = sum_j filters[f][o, j] * A[j]   (bf16 outputs)."""
    c_in, n_pad, _ = A_bf.shape
    c_out = int(filters[0].shape[0])
    nt = n_pad // t
    n_f = len(filters)
    kernel = functools.partial(
        _combine2_kernel if n_f == 2 else _combine1_kernel, c_in=c_in)

    flops = 2 * n_f * c_out * c_in * n_pad * n_pad
    bytes_accessed = (c_out * c_in * n_pad * n_pad * 2        # A read per c_out
                      + n_f * c_out * n_pad * n_pad * 2)      # combined writes

    outs = pl.pallas_call(
        kernel,
        out_shape=tuple(
            jax.ShapeDtypeStruct((c_out, n_pad, n_pad), jnp.bfloat16)
            for _ in range(n_f)),
        grid_spec=pltpu.PrefetchScalarGridSpec(
            num_scalar_prefetch=0,
            grid=(c_out, nt, nt),
            in_specs=(
                [pl.BlockSpec(memory_space=pltpu.MemorySpace.SMEM)] * n_f
                + [pl.BlockSpec((c_in, t, t), lambda i, mi, ni: (0, mi, ni))]),
            out_specs=tuple(
                pl.BlockSpec((None, t, t), lambda i, mi, ni: (i, mi, ni))
                for _ in range(n_f)),
        ),
        compiler_params=pltpu.CompilerParams(
            dimension_semantics=("parallel", "parallel", "parallel"),
            vmem_limit_bytes=_vmem_limit_bytes(),
        ),
        cost_estimate=pl.CostEstimate(flops=flops, transcendentals=0,
                                      bytes_accessed=bytes_accessed),
    )(*filters, A_bf)
    return outs


def _batched_matmul(A_comb, B_comb, t, n):
    """H[i] = A_comb[i] @ B_comb[i], tiled on the MXU, f32 output."""
    c_out, n_pad, _ = A_comb.shape
    c_out = int(c_out)
    nt = n_pad // t

    flops = 2 * c_out * n_pad * n_pad * n_pad
    bytes_accessed = (2 * c_out * n_pad * n_pad * 2 * nt      # bf16 operand streams
                      + c_out * n_pad * n_pad * 4)            # f32 output

    H_pad = pl.pallas_call(
        _mm_kernel,
        out_shape=jax.ShapeDtypeStruct((c_out, n_pad, n_pad), jnp.float32),
        grid_spec=pltpu.PrefetchScalarGridSpec(
            num_scalar_prefetch=0,
            grid=(c_out, nt, nt, nt),
            in_specs=[
                pl.BlockSpec((None, t, t), lambda i, mi, ni, ki: (i, mi, ki)),
                pl.BlockSpec((None, t, t), lambda i, mi, ni, ki: (i, ki, ni)),
            ],
            out_specs=pl.BlockSpec((None, t, t),
                                   lambda i, mi, ni, ki: (i, mi, ni)),
        ),
        compiler_params=pltpu.CompilerParams(
            dimension_semantics=("parallel", "parallel", "parallel",
                                 "arbitrary"),
            vmem_limit_bytes=_vmem_limit_bytes(),
        ),
        cost_estimate=pl.CostEstimate(flops=flops, transcendentals=0,
                                      bytes_accessed=bytes_accessed),
    )(A_comb, B_comb)

    return H_pad if n_pad == n else H_pad[:, :n, :n]


# ----------------------------- wrappers ------------------------------------ #

def gt_layer_first(A_dense, w1, w2, *, tile=None):
    """GTLayer.forward with first=True.  Returns (H [C_out,N,N], [f1, f2])."""
    n = int(A_dense.shape[-1])
    f1 = jax.nn.softmax(w1.astype(jnp.float32), axis=1)
    f2 = jax.nn.softmax(w2.astype(jnp.float32), axis=1)

    t = tile if tile is not None else _pick_tile(n)
    n_pad = pl.cdiv(n, t) * t
    A_bf = _pad_nn(A_dense, n_pad)                      # bf16, lane-dense
    A_comb, B_comb = _combine(A_bf, (f1, f2), t)        # hoisted channel combine
    H = _batched_matmul(A_comb, B_comb, t, n)
    return H, [f1, f2]


def gt_layer_not_first(A_dense, H_prev, w1, *, tile=None):
    """GTLayer.forward with first=False.  Returns (H [C_out,N,N], [f1])."""
    n = int(A_dense.shape[-1])
    f1 = jax.nn.softmax(w1.astype(jnp.float32), axis=1)

    t = tile if tile is not None else _pick_tile(n)
    n_pad = pl.cdiv(n, t) * t
    A_bf = _pad_nn(A_dense, n_pad)
    (B_comb,) = _combine(A_bf, (f1,), t)
    Hp_bf = _pad_nn(H_prev, n_pad)                      # bf16 MXU operand
    H = _batched_matmul(Hp_bf, B_comb, t, n)
    return H, [f1]


# ----------------------------- reference (plain JAX, f32) ------------------ #

def _ref_first(A_dense, w1, w2):
    f1 = jax.nn.softmax(w1, axis=1)
    f2 = jax.nn.softmax(w2, axis=1)
    a = jnp.einsum('oc,cmn->omn', f1, A_dense)
    b = jnp.einsum('oc,cmn->omn', f2, A_dense)
    return jnp.einsum('omk,okn->omn', a, b)


def _ref_not_first(A_dense, H_prev, w1):
    f1 = jax.nn.softmax(w1, axis=1)
    b = jnp.einsum('oc,cmn->omn', f1, A_dense)
    return jnp.einsum('omk,okn->omn', H_prev, b)


# ----------------------------- main ----------------------------------------- #

if __name__ == "__main__":
    in_channels = 4      # number of edge types in A
    out_channels = 2
    num_nodes = 384      # -> auto tile 128, exercises the 3x3x3 K-tiled path

    key = jax.random.PRNGKey(0)
    k_a_val, k_a_msk, k_w1, k_w2 = jax.random.split(key, 4)

    # Sparse-ish dense adjacencies per edge type (dense equivalent of the
    # COO (edge_index, edge_value) lists the torch module consumes).
    vals = jax.random.uniform(k_a_val, (in_channels, num_nodes, num_nodes),
                              dtype=jnp.float32)
    mask = (jax.random.uniform(k_a_msk, (in_channels, num_nodes, num_nodes))
            < 0.2).astype(jnp.float32)
    A_dense = vals * mask

    # GTConv parameter init: normal(std=0.01), bias is None.
    w1 = 0.01 * jax.random.normal(k_w1, (out_channels, in_channels), jnp.float32)
    w2 = 0.01 * jax.random.normal(k_w2, (out_channels, in_channels), jnp.float32)

    # first=True path (tolerances account for bf16 MXU operands, f32 accum).
    H, W = gt_layer_first(A_dense, w1, w2)
    H = jax.block_until_ready(H)
    H_ref = _ref_first(A_dense, w1, w2)
    assert H.shape == (out_channels, num_nodes, num_nodes)
    assert jnp.allclose(H, H_ref, rtol=2e-2, atol=5e-2), "first=True mismatch"
    assert len(W) == 2 and W[0].shape == (out_channels, in_channels)

    # first=False path (feed the previous H back in, as GTLayer does).
    H2, W2 = gt_layer_not_first(A_dense, H, w1)
    H2 = jax.block_until_ready(H2)
    H2_ref = _ref_not_first(A_dense, H_ref, w1)
    assert jnp.allclose(H2, H2_ref, rtol=3e-2, atol=5e-1), "first=False mismatch"
    assert len(W2) == 1

    # TODO(synk): output is the dense equivalent of torch_sparse's COO
    # (edge_index, edge_value); extraction of explicit index lists is left to
    # the (host-side) caller since sparse COO has no direct Pallas equivalent.
    print("KERNEL_OK")
</pallas_src>

<mosaic_0001>
module attributes {stable_mosaic.version = 11 : i64} {
  func.func @_combine2_kernel(%arg0: i32, %arg1: i32, %arg2: i32, %arg3: memref<2x4xf32, #tpu.memory_space<smem>>, %arg4: memref<2x4xf32, #tpu.memory_space<smem>>, %arg5: memref<4x128x128xbf16, #tpu.memory_space<vmem>>, %arg6: memref<1x128x128xbf16, #tpu.memory_space<vmem>>, %arg7: memref<1x128x128xbf16, #tpu.memory_space<vmem>>) attributes {dimension_semantics = [#tpu.dimension_semantics<parallel>, #tpu.dimension_semantics<parallel>, #tpu.dimension_semantics<parallel>], iteration_bounds = array<i64: 2, 3, 3>, scalar_prefetch = 0 : i64, scratch_operands = 0 : i64, tpu.core_type = #tpu.core_type<tc>, window_params = [{transform_indices = @transform_0, window_bounds = array<i64: 2, 4>}, {transform_indices = @transform_1, window_bounds = array<i64: 2, 4>}, {transform_indices = @transform_2, window_bounds = array<i64: 4, 128, 128>}, {transform_indices = @transform_3, window_bounds = array<i64: 1, 128, 128>}, {transform_indices = @transform_4, window_bounds = array<i64: 1, 128, 128>}]} {
    %c0 = arith.constant 0 : index
    %c0_0 = arith.constant 0 : index
    %c0_1 = arith.constant 0 : index
    %0 = vector.load %arg5[%c0, %c0_0, %c0_1] : memref<4x128x128xbf16, #tpu.memory_space<vmem>>, vector<1x128x128xbf16>
    %1 = vector.shape_cast %0 : vector<1x128x128xbf16> to vector<128x128xbf16>
    %2 = arith.extf %1 : vector<128x128xbf16> to vector<128x128xf32>
    %3 = arith.index_cast %arg0 : i32 to index
    %c0_2 = arith.constant 0 : index
    %4 = memref.load %arg3[%3, %c0_2] : memref<2x4xf32, #tpu.memory_space<smem>>
    %5 = vector.broadcast %4 : f32 to vector<128x128xf32>
    %6 = arith.mulf %5, %2 : vector<128x128xf32>
    %7 = arith.index_cast %arg0 : i32 to index
    %c0_3 = arith.constant 0 : index
    %8 = memref.load %arg4[%7, %c0_3] : memref<2x4xf32, #tpu.memory_space<smem>>
    %9 = vector.broadcast %8 : f32 to vector<128x128xf32>
    %10 = arith.mulf %9, %2 : vector<128x128xf32>
    %c1 = arith.constant 1 : index
    %c0_4 = arith.constant 0 : index
    %c0_5 = arith.constant 0 : index
    %11 = vector.load %arg5[%c1, %c0_4, %c0_5] : memref<4x128x128xbf16, #tpu.memory_space<vmem>>, vector<1x128x128xbf16>
    %12 = vector.shape_cast %11 : vector<1x128x128xbf16> to vector<128x128xbf16>
    %13 = arith.extf %12 : vector<128x128xbf16> to vector<128x128xf32>
    %14 = arith.index_cast %arg0 : i32 to index
    %c1_6 = arith.constant 1 : index
    %15 = memref.load %arg3[%14, %c1_6] : memref<2x4xf32, #tpu.memory_space<smem>>
    %16 = vector.broadcast %15 : f32 to vector<128x128xf32>
    %17 = arith.mulf %16, %13 : vector<128x128xf32>
    %18 = arith.addf %6, %17 : vector<128x128xf32>
    %19 = arith.index_cast %arg0 : i32 to index
    %c1_7 = arith.constant 1 : index
    %20 = memref.load %arg4[%19, %c1_7] : memref<2x4xf32, #tpu.memory_space<smem>>
    %21 = vector.broadcast %20 : f32 to vector<128x128xf32>
    %22 = arith.mulf %21, %13 : vector<128x128xf32>
    %23 = arith.addf %10, %22 : vector<128x128xf32>
    %c2 = arith.constant 2 : index
    %c0_8 = arith.constant 0 : index
    %c0_9 = arith.constant 0 : index
    %24 = vector.load %arg5[%c2, %c0_8, %c0_9] : memref<4x128x128xbf16, #tpu.memory_space<vmem>>, vector<1x128x128xbf16>
    %25 = vector.shape_cast %24 : vector<1x128x128xbf16> to vector<128x128xbf16>
    %26 = arith.extf %25 : vector<128x128xbf16> to vector<128x128xf32>
    %27 = arith.index_cast %arg0 : i32 to index
    %c2_10 = arith.constant 2 : index
    %28 = memref.load %arg3[%27, %c2_10] : memref<2x4xf32, #tpu.memory_space<smem>>
    %29 = vector.broadcast %28 : f32 to vector<128x128xf32>
    %30 = arith.mulf %29, %26 : vector<128x128xf32>
    %31 = arith.addf %18, %30 : vector<128x128xf32>
    %32 = arith.index_cast %arg0 : i32 to index
    %c2_11 = arith.constant 2 : index
    %33 = memref.load %arg4[%32, %c2_11] : memref<2x4xf32, #tpu.memory_space<smem>>
    %34 = vector.broadcast %33 : f32 to vector<128x128xf32>
    %35 = arith.mulf %34, %26 : vector<128x128xf32>
    %36 = arith.addf %23, %35 : vector<128x128xf32>
    %c3 = arith.constant 3 : index
    %c0_12 = arith.constant 0 : index
    %c0_13 = arith.constant 0 : index
    %37 = vector.load %arg5[%c3, %c0_12, %c0_13] : memref<4x128x128xbf16, #tpu.memory_space<vmem>>, vector<1x128x128xbf16>
    %38 = vector.shape_cast %37 : vector<1x128x128xbf16> to vector<128x128xbf16>
    %39 = arith.extf %38 : vector<128x128xbf16> to vector<128x128xf32>
    %40 = arith.index_cast %arg0 : i32 to index
    %c3_14 = arith.constant 3 : index
    %41 = memref.load %arg3[%40, %c3_14] : memref<2x4xf32, #tpu.memory_space<smem>>
    %42 = vector.broadcast %41 : f32 to vector<128x128xf32>
    %43 = arith.mulf %42, %39 : vector<128x128xf32>
    %44 = arith.addf %31, %43 : vector<128x128xf32>
    %45 = arith.index_cast %arg0 : i32 to index
    %c3_15 = arith.constant 3 : index
    %46 = memref.load %arg4[%45, %c3_15] : memref<2x4xf32, #tpu.memory_space<smem>>
    %47 = vector.broadcast %46 : f32 to vector<128x128xf32>
    %48 = arith.mulf %47, %39 : vector<128x128xf32>
    %49 = arith.addf %36, %48 : vector<128x128xf32>
    %50 = arith.truncf %44 : vector<128x128xf32> to vector<128x128xbf16>
    %c0_16 = arith.constant 0 : index
    %c0_17 = arith.constant 0 : index
    %c0_18 = arith.constant 0 : index
    %51 = vector.load %arg6[%c0_16, %c0_17, %c0_18] : memref<1x128x128xbf16, #tpu.memory_space<vmem>>, vector<1x128x128xbf16>
    %52 = vector.shape_cast %51 : vector<1x128x128xbf16> to vector<128x128xbf16>
    %53 = vector.shape_cast %50 : vector<128x128xbf16> to vector<1x128x128xbf16>
    tpu.vector_store %arg6[%c0_16, %c0_17, %c0_18], %53 {strides = array<i32>} : memref<1x128x128xbf16, #tpu.memory_space<vmem>>, vector<1x128x128xbf16>,
    %54 = arith.truncf %49 : vector<128x128xf32> to vector<128x128xbf16>
    %c0_19 = arith.constant 0 : index
    %c0_20 = arith.constant 0 : index
    %c0_21 = arith.constant 0 : index
    %55 = vector.load %arg7[%c0_19, %c0_20, %c0_21] : memref<1x128x128xbf16, #tpu.memory_space<vmem>>, vector<1x128x128xbf16>
    %56 = vector.shape_cast %55 : vector<1x128x128xbf16> to vector<128x128xbf16>
    %57 = vector.shape_cast %54 : vector<128x128xbf16> to vector<1x128x128xbf16>
    tpu.vector_store %arg7[%c0_19, %c0_20, %c0_21], %57 {strides = array<i32>} : memref<1x128x128xbf16, #tpu.memory_space<vmem>>, vector<1x128x128xbf16>,
    return
  }
  func.func @transform_0(%arg0: i32, %arg1: i32, %arg2: i32) -> (i32, i32) {
    %c0_i32 = arith.constant 0 : i32
    %c0_i32_0 = arith.constant 0 : i32
    %c0_i32_1 = arith.constant 0 : i32
    return %c0_i32, %c0_i32_0 : i32, i32
  }
  func.func @transform_1(%arg0: i32, %arg1: i32, %arg2: i32) -> (i32, i32) {
    %c0_i32 = arith.constant 0 : i32
    %c0_i32_0 = arith.constant 0 : i32
    %c0_i32_1 = arith.constant 0 : i32
    return %c0_i32, %c0_i32_0 : i32, i32
  }
  func.func @transform_2(%arg0: i32, %arg1: i32, %arg2: i32) -> (i32, i32, i32) {
    %c0_i32 = arith.constant 0 : i32
    %c0_i32_0 = arith.constant 0 : i32
    return %c0_i32, %arg1, %arg2 : i32, i32, i32
  }
  func.func @transform_3(%arg0: i32, %arg1: i32, %arg2: i32) -> (i32, i32, i32) {
    %c0_i32 = arith.constant 0 : i32
    return %arg0, %arg1, %arg2 : i32, i32, i32
  }
  func.func @transform_4(%arg0: i32, %arg1: i32, %arg2: i32) -> (i32, i32, i32) {
    %c0_i32 = arith.constant 0 : i32
    return %arg0, %arg1, %arg2 : i32, i32, i32
  }
}

</mosaic_0001>

<llo_original>
// kernel: tpu_custom_call.1
$region0: #{tpu_custom_call.1}
  #allocation0 [shape = 'u32[]', space=smem, size = 0x4, offset = 0x4, fixed_abs, tag = 'smem constant byte address 0x4 - core index']
  #allocation1 [shape = 'u32[144,128]{1,0:T(1,128)}', space=vmem, size = 0x12000, scoped, tag = 'internal scratch']
  #allocation12 [shape = 's32[]', space=sflag, size = 0x4, offset = 0, fixed_abs, tag = 'sflag constant byte address 0x0 - dummy sync flag']
  %s0 = inlined_call_operand.hbm [shape: f32[2,4], index: 0, kind: input, shape index: {}]
  %s1 = inlined_call_operand.hbm [shape: f32[2,4], index: 1, kind: input, shape index: {}]
  %s2 = inlined_call_operand.hbm [shape: bf16[4,384,384], index: 2, kind: input, shape index: {}]
  %s3 = inlined_call_operand.hbm [shape: bf16[2,384,384], index: 3, kind: output, shape index: {0}]
  %s4 = inlined_call_operand.hbm [shape: bf16[2,384,384], index: 4, kind: output, shape index: {1}]
  %5 = xla_tuple %s3, %s4
  %s6 = sld [smem:[#allocation0]]
  $region65: #{tpu_custom_call.1} parent=0
    _
  %s8 = ssub.s32 1, %s6
  %s9 = scalar_select 0, %s8, %s6
  $region1: #{tpu_custom_call.1} parent=0
    #allocation2 [shape = 'u8[1024]{0}', space=smem, size = 0x400, scoped, tag = 'input window, operand 0, single buffered']
    #allocation3 [shape = 's32[2]{0}', space=sflag, size = 0x8, scoped, tag = 'scoped memory for tpu_custom_call.1']
    #allocation4 [shape = 's32[2]{0}', space=sflag, size = 0x8, scoped, tag = 'scoped memory for tpu_custom_call.1']
    #allocation5 [shape = 's32[2]{0}', space=sflag, size = 0x8, scoped, tag = 'scoped memory for tpu_custom_call.1']
    #allocation6 [shape = 'u8[1024]{0}', space=smem, size = 0x400, scoped, tag = 'input window, operand 1, single buffered']
    #allocation7 [shape = 's32[1]{0}', space=sflag, size = 0x4, scoped, tag = 'scoped memory for tpu_custom_call.1']
    #allocation8 [shape = 'u8[262144]{0}', space=vmem, size = 0x40000, scoped, tag = 'input window, operand 2']
    #allocation9 [shape = 'u8[65536]{0}', space=vmem, size = 0x10000, scoped, tag = 'output window, operand 0']
    #allocation10 [shape = 'u8[65536]{0}', space=vmem, size = 0x10000, scoped, tag = 'output window, operand 1']
    #allocation11 [shape = 's32[2]{0}', space=sflag, size = 0x8, scoped, tag = 'scoped memory for tpu_custom_call.1']
    %10 = vsyncpa [#allocation5], 0
    %11 = vsyncpa [#allocation7], 0
    %12 = vsyncpa [#allocation3], 0
    %s13 = scalar_lea.sflag [#allocation3], 1
    %14 = vsyncpa %s13, 0
    %15 = vsyncpa [#allocation4], 0
    %s16 = scalar_lea.sflag [#allocation4], 1
    %17 = vsyncpa %s16, 0
    %18 = vsyncpa [#allocation11], 0
    %s19 = scalar_lea.sflag [#allocation11], 1
    %20 = vsyncpa %s19, 0
    loop: start=0, step=1, limit=20
    $region2: #{tpu_custom_call.1} parent=1 // loop_pre_header
      _
    $region3: #{tpu_custom_call.1} parent=1 // loop_header
      %s22 = sphi 0, %s26
      %p23 = scmp.ge.s32.totalorder %s22, 20
      %s29 = sphi 0, %s48
      %s30 = sphi 0, %s44
      %s31 = sphi 0, %s40
      %s32 = sphi 0, %s29
      %s33 = sphi 0, %s30
      %s34 = sphi 0, %s31
      %s35 = sphi 0, %s32
      %s36 = sphi 0, %s33
      %s37 = sphi 0, %s34
      %s49 = sphi 0, %s49
      %s51 = sphi 0, %s49
      %s52 = sphi 0, %s51
      %s66 = sphi 0, %s52
      %s70 = sphi 0, %s70
      %s72 = sphi 0, %s70
      %s73 = sphi 0, %s72
      %s87 = sphi 0, %s73
      %s95 = sphi 0, %s97
      %s98 = sphi 0, %s95
      %s99 = sphi 0, %s98
      %s115 = sphi 0, %s99
      %s125 = sphi 0, %s127
      %s128 = sphi 0, %s125
      %s129 = sphi 0, %s128
      %s145 = sphi 0, %s129
      %s155 = sphi 0, %s157
      %s158 = sphi 0, %s155
      %s159 = sphi 0, %s158
      %s175 = sphi 0, %s159
    $region4: #{tpu_custom_call.1} parent=1 // loop_header_branch
      %25 = sbr.rel (%p23) target = $region8
    $region5: #{tpu_custom_call.1} parent=1 // loop_body
      %s27 = ssub.s32 %s22, 1
      %s28 = ssub.s32 %s22, 2
      %s38 = sadd.s32 1, %s31
      %p39 = scmp.ge.s32.totalorder %s38, 3
      %s40 = scalar_select %p39, 0, %s38
      %s41 = sadd.s32 1, %s30
      %s42 = scalar_select %p39, %s41, %s30
      %p43 = scmp.ge.s32.totalorder %s42, 3
      %s44 = scalar_select %p43, 0, %s42
      %s45 = sadd.s32 1, %s29
      %s46 = scalar_select %p43, %s45, %s29
      %p47 = scmp.ge.s32.totalorder %s46, 2
      %s48 = scalar_select %p47, 0, %s46
      %s50 = sadd.s32 %s49, 1
      %p53 = scmp.eq.s32.totalorder %s22, 17
      %p54 = scmp.ne.s32.totalorder %s49, %s51
      %p55 = scmp.eq.s32.totalorder %s22, 0
      %p56 = por %p54, %p55
      %p57 = scmp.ne.s32.totalorder %s49, %s51
      %p58 = scmp.eq.s32.totalorder %s27, 17
      %p59 = por %p57, %p58
      %p60 = scmp.ne.s32.totalorder %s51, %s52
      %p61 = scmp.eq.s32.totalorder %s27, 0
      %p62 = por %p60, %p61
      %p63 = scmp.ne.s32.totalorder %s51, %s52
      %p64 = scmp.eq.s32.totalorder %s28, 17
      %p65 = por %p63, %p64
      %p67 = scmp.ne.s32.totalorder %s52, %s66
      %p68 = scmp.eq.s32.totalorder %s28, 0
      %p69 = por %p67, %p68
      %s71 = sadd.s32 %s70, 1
      %p74 = scmp.eq.s32.totalorder %s22, 17
      %p75 = scmp.ne.s32.totalorder %s70, %s72
      %p76 = scmp.eq.s32.totalorder %s22, 0
      %p77 = por %p75, %p76
      %p78 = scmp.ne.s32.totalorder %s70, %s72
      %p79 = scmp.eq.s32.totalorder %s27, 17
      %p80 = por %p78, %p79
      %p81 = scmp.ne.s32.totalorder %s72, %s73
      %p82 = scmp.eq.s32.totalorder %s27, 0
      %p83 = por %p81, %p82
      %p84 = scmp.ne.s32.totalorder %s72, %s73
      %p85 = scmp.eq.s32.totalorder %s28, 17
      %p86 = por %p84, %p85
      %p88 = scmp.ne.s32.totalorder %s73, %s87
      %p89 = scmp.eq.s32.totalorder %s28, 0
      %p90 = por %p88, %p89
      %s91 = ssub.s32 %s30, %s44
      %s92 = ssub.s32 %s31, %s40
      %s93 = sor.u32 %s91, %s92
      %p94 = scmp.eq.s32.totalorder %s93, 0
      %s96 = sadd.s32 %s95, 1
      %s97 = scalar_select %p94, %s95, %s96
      %p100 = pneg %p94
      %p101 = scmp.eq.s32.totalorder %s22, 17
      %p102 = por %p100, %p101
      %p103 = scmp.ne.s32.totalorder %s95, %s98
      %p104 = scmp.eq.s32.totalorder %s22, 0
      %p105 = por %p103, %p104
      %p106 = scmp.ne.s32.totalorder %s95, %s98
      %p107 = scmp.eq.s32.totalorder %s27, 17
      %p108 = por %p106, %p107
      %p109 = scmp.ne.s32.totalorder %s98, %s99
      %p110 = scmp.eq.s32.totalorder %s27, 0
      %p111 = por %p109, %p110
      %p112 = scmp.ne.s32.totalorder %s98, %s99
      %p113 = scmp.eq.s32.totalorder %s28, 17
      %p114 = por %p112, %p113
      %p116 = scmp.ne.s32.totalorder %s99, %s115
      %p117 = scmp.eq.s32.totalorder %s28, 0
      %p118 = por %p116, %p117
      %s119 = ssub.s32 %s29, %s48
      %s120 = ssub.s32 %s30, %s44
      %s121 = sor.u32 %s119, %s120
      %s122 = ssub.s32 %s31, %s40
      %s123 = sor.u32 %s121, %s122
      %p124 = scmp.eq.s32.totalorder %s123, 0
      %s126 = sadd.s32 %s125, 1
      %s127 = scalar_select %p124, %s125, %s126
      %p130 = pneg %p124
      %p131 = scmp.eq.s32.totalorder %s22, 17
      %p132 = por %p130, %p131
      %p133 = scmp.ne.s32.totalorder %s125, %s128
      %p134 = scmp.eq.s32.totalorder %s22, 0
      %p135 = por %p133, %p134
      %p136 = scmp.ne.s32.totalorder %s125, %s128
      %p137 = scmp.eq.s32.totalorder %s27, 17
      %p138 = por %p136, %p137
      %p139 = scmp.ne.s32.totalorder %s128, %s129
      %p140 = scmp.eq.s32.totalorder %s27, 0
      %p141 = por %p139, %p140
      %p142 = scmp.ne.s32.totalorder %s128, %s129
      %p143 = scmp.eq.s32.totalorder %s28, 17
      %p144 = por %p142, %p143
      %p146 = scmp.ne.s32.totalorder %s129, %s145
      %p147 = scmp.eq.s32.totalorder %s28, 0
      %p148 = por %p146, %p147
      %s149 = ssub.s32 %s29, %s48
      %s150 = ssub.s32 %s30, %s44
      %s151 = sor.u32 %s149, %s150
      %s152 = ssub.s32 %s31, %s40
      %s153 = sor.u32 %s151, %s152
      %p154 = scmp.eq.s32.totalorder %s153, 0
      %s156 = sadd.s32 %s155, 1
      %s157 = scalar_select %p154, %s155, %s156
      %p160 = pneg %p154
      %p161 = scmp.eq.s32.totalorder %s22, 17
      %p162 = por %p160, %p161
      %p163 = scmp.ne.s32.totalorder %s155, %s158
      %p164 = scmp.eq.s32.totalorder %s22, 0
      %p165 = por %p163, %p164
      %p166 = scmp.ne.s32.totalorder %s155, %s158
      %p167 = scmp.eq.s32.totalorder %s27, 17
      %p168 = por %p166, %p167
      %p169 = scmp.ne.s32.totalorder %s158, %s159
      %p170 = scmp.eq.s32.totalorder %s27, 0
      %p171 = por %p169, %p170
      %p172 = scmp.ne.s32.totalorder %s158, %s159
      %p173 = scmp.eq.s32.totalorder %s28, 17
      %p174 = por %p172, %p173
      %p176 = scmp.ne.s32.totalorder %s159, %s175
      %p177 = scmp.eq.s32.totalorder %s28, 0
      %p178 = por %p176, %p177
      %p179 = scmp.le.s32.totalorder 1, %s22
      %p180 = scmp.lt.s32.totalorder %s22, 19
      %p181 = pnand %p179, %p180
      %p182 = pneg %p181
      // Predicated region
      $region9: #{tpu_custom_call.1} parent=5 // pred_check
        _
      $region10: #{tpu_custom_call.1} parent=5 // pred_check_branch
        %184 = sbr.rel (%p181) target = $region12
      $region11: #{tpu_custom_call.1} parent=5 // pred_region
        %s185 = ssub.s32 %s22, 1
        // Predicated region
        $region13: #{tpu_custom_call.1} parent=11 // pred_check
          %p186 = pneg %p62
        $region14: #{tpu_custom_call.1} parent=11 // pred_check_branch
          %188 = sbr.rel (%p186) target = $region16
        $region15: #{tpu_custom_call.1} parent=11 // pred_region
          %s190 = ssub.s32 32, 32
          %191 = vsyncadd [#allocation5], %s190
          %194 = dma.hbm_to_smem %s0, 32, [#allocation2], [#allocation5]
        $region16: #{tpu_custom_call.1} parent=11 // pred_fallthru
          _
        // Predicated region
        $region17: #{tpu_custom_call.1} parent=11 // pred_check
          %p195 = pneg %p83
        $region18: #{tpu_custom_call.1} parent=11 // pred_check_branch
          %197 = sbr.rel (%p195) target = $region20
        $region19: #{tpu_custom_call.1} parent=11 // pred_region
          %s199 = ssub.s32 32, 32
          %200 = vsyncadd [#allocation7], %s199
          %203 = dma.hbm_to_smem %s1, 32, [#allocation6], [#allocation7]
        $region20: #{tpu_custom_call.1} parent=11 // pred_fallthru
          _
      $region12: #{tpu_custom_call.1} parent=5 // pred_fallthru
        _
      %p204 = scmp.lt.s32.totalorder %s22, 18
      // Predicated region
      $region21: #{tpu_custom_call.1} parent=5 // pred_check
        %p205 = pneg %p204
      $region22: #{tpu_custom_call.1} parent=5 // pred_check_branch
        %207 = sbr.rel (%p205) target = $region24
      $region23: #{tpu_custom_call.1} parent=5 // pred_region
        // Predicated region
        $region25: #{tpu_custom_call.1} parent=23 // pred_check
          %p208 = pneg %p105
        $region26: #{tpu_custom_call.1} parent=23 // pred_check_branch
          %210 = sbr.rel (%p208) target = $region28
        $region27: #{tpu_custom_call.1} parent=23 // pred_region
          #allocation13 [shape = 'u32[6]{0}', space=smem, size = 0x18, scoped, tag = 'DMA stride descriptor']
          %s211 = sand.u32 %s95, 1
          %s212 = scalar_lea.sflag [#allocation3], %s211
          %s213 = sand.u32 %s95, 1
          %s214 = smul.addr %s213, 256
          %s215 = scalar_lea.vmem [#allocation8], %s214
          %s216 = smul.u32 16, %s30
          %s218 = ssub.s32 4096, 4096
          %219 = vsyncadd %s212, %s218
          %s220 = smul.addr %s216, 3
          %s221 = sadd.s32 %s31, %s220
          %s222 = smul.addr %s221, 64
          %s223 = scalar_lea.hbm %s2, %s222
          %s225 = sshll.u32 1, 14
          %s226 = sxor.u32 4294967295, %s225
          %s228 = sld [smem:[#allocation0]]
          %s229 = sadd.s32 2, %s228
          %s231 = sshll.u32 7, 26
          %s232 = sxor.u32 4294967295, %s231
          %s233 = sand.u32 0, %s232
          %s234 = sshll.u32 %s229, 26
          %s235 = sor.u32 %s233, %s234
          %s236 = sshll.u32 %s215, 4
          %s237 = int_to_ptr.vmem [resolvable:$true] %s236
          %243 = sst [smem:[#allocation13]] 9216
          %s244 = scalar_lea.smem [#allocation13], 1
          %245 = sst [smem:[%s244]] 1024
          %s246 = scalar_lea.smem [#allocation13], 2
          %247 = sst [smem:[%s246]] 16
          %s248 = scalar_lea.smem [#allocation13], 3
          %249 = sst [smem:[%s248]] 192
          %s250 = scalar_lea.smem [#allocation13], 4
          %251 = sst [smem:[%s250]] 64
          %s252 = scalar_lea.smem [#allocation13], 5
          %253 = sst [smem:[%s252]] 4
          %255 = dma.general %s223, 4096, %s237, %s212, [#allocation12], [#allocation13], %s235, 0
        $region28: #{tpu_custom_call.1} parent=23 // pred_fallthru
          _
      $region24: #{tpu_custom_call.1} parent=5 // pred_fallthru
        _
      %p256 = scmp.le.s32.totalorder 1, %s22
      %p257 = scmp.lt.s32.totalorder %s22, 19
      %p258 = pnand %p256, %p257
      %p259 = pneg %p258
      // Predicated region
      $region29: #{tpu_custom_call.1} parent=5 // pred_check
        _
      $region30: #{tpu_custom_call.1} parent=5 // pred_check_branch
        %261 = sbr.rel (%p258) target = $region32
      $region31: #{tpu_custom_call.1} parent=5 // pred_region
        %s262 = ssub.s32 %s22, 1
        // Predicated region
        $region33: #{tpu_custom_call.1} parent=31 // pred_check
          %p263 = pneg %p62
        $region34: #{tpu_custom_call.1} parent=31 // pred_check_branch
          %265 = sbr.rel (%p263) target = $region36
        $region35: #{tpu_custom_call.1} parent=31 // pred_region
          %266 = dma.done [#allocation5], 32
        $region36: #{tpu_custom_call.1} parent=31 // pred_fallthru
          _
        // Predicated region
        $region37: #{tpu_custom_call.1} parent=31 // pred_check
          %p267 = pneg %p83
        $region38: #{tpu_custom_call.1} parent=31 // pred_check_branch
          %269 = sbr.rel (%p267) target = $region40
        $region39: #{tpu_custom_call.1} parent=31 // pred_region
          %270 = dma.done [#allocation7], 32
        $region40: #{tpu_custom_call.1} parent=31 // pred_fallthru
          _
        %s271 = sand.u32 %s98, 1
        %s272 = scalar_lea.sflag [#allocation3], %s271
        %s273 = sand.u32 %s98, 1
        %s274 = smul.addr %s273, 256
        %s275 = scalar_lea.vmem [#allocation8], %s274
        // Predicated region
        $region41: #{tpu_custom_call.1} parent=31 // pred_check
          %p276 = pneg %p111
        $region42: #{tpu_custom_call.1} parent=31 // pred_check_branch
          %278 = sbr.rel (%p276) target = $region44
        $region43: #{tpu_custom_call.1} parent=31 // pred_region
          %279 = dma.done %s272, 4096
        $region44: #{tpu_custom_call.1} parent=31 // pred_fallthru
          _
        %280 = sfence
        %p281 = pneg %p62
        %p282 = pneg %p59
        %p283 = pneg %p83
        %p284 = pneg %p80
        %s285 = sand.u32 %s98, 1
        %s286 = scalar_lea.sflag [#allocation3], %s285
        %s287 = sand.u32 %s98, 1
        %s288 = smul.addr %s287, 256
        %s289 = scalar_lea.vmem [#allocation8], %s288
        %p290 = pneg %p111
        %p291 = pneg %p108
        %p292 = pneg %p141
        %p293 = pneg %p138
        %s294 = sand.u32 %s128, 1
        %s295 = scalar_lea.sflag [#allocation4], %s294
        %s296 = sand.u32 %s128, 1
        %s297 = smul.addr %s296, 64
        %s298 = scalar_lea.vmem [#allocation9], %s297
        %p299 = pneg %p171
        %p300 = pneg %p168
        %s301 = sand.u32 %s158, 1
        %s302 = scalar_lea.sflag [#allocation11], %s301
        %s303 = sand.u32 %s158, 1
        %s304 = smul.addr %s303, 64
        %s305 = scalar_lea.vmem [#allocation10], %s304
        %s306 = smul.u32 16, %s33
        %s307 = smul.u32 16, %s33
        %s308 = smul.u32 16, %s33
        %v309 = vld [vmem:[%s275] sm:$0xf]
        %v310 = vld [vmem:[%s275 + $0x4] sm:$0xf]
        %v311 = vld [vmem:[%s275 + $0x8] sm:$0xf]
        %v312 = vld [vmem:[%s275 + $0xc] sm:$0xf]
        %v313 = vld [vmem:[%s275 + $0x10] sm:$0xf]
        %v314 = vld [vmem:[%s275 + $0x14] sm:$0xf]
        %v315 = vld [vmem:[%s275 + $0x18] sm:$0xf]
        %v316 = vld [vmem:[%s275 + $0x1c] sm:$0xf]
        %v317 = vld [vmem:[%s275 + $0x20] sm:$0xf]
        %v318 = vld [vmem:[%s275 + $0x24] sm:$0xf]
        %v319 = vld [vmem:[%s275 + $0x28] sm:$0xf]
        %v320 = vld [vmem:[%s275 + $0x2c] sm:$0xf]
        %v321 = vld [vmem:[%s275 + $0x30] sm:$0xf]
        %v322 = vld [vmem:[%s275 + $0x34] sm:$0xf]
        %v323 = vld [vmem:[%s275 + $0x38] sm:$0xf]
        %v324 = vld [vmem:[%s275 + $0x3c] sm:$0xf]
        %v325 = vunpack.c.l.bf16 %v309
        %v326 = vunpack.c.l.bf16 %v310
        %v327 = vunpack.c.l.bf16 %v311
        %v328 = vunpack.c.l.bf16 %v312
        %v329 = vunpack.c.l.bf16 %v313
        %v330 = vunpack.c.l.bf16 %v314
        %v331 = vunpack.c.l.bf16 %v315
        %v332 = vunpack.c.l.bf16 %v316
        %v333 = vunpack.c.l.bf16 %v317
        %v334 = vunpack.c.l.bf16 %v318
        %v335 = vunpack.c.l.bf16 %v319
        %v336 = vunpack.c.l.bf16 %v320
        %v337 = vunpack.c.l.bf16 %v321
        %v338 = vunpack.c.l.bf16 %v322
        %v339 = vunpack.c.l.bf16 %v323
        %v340 = vunpack.c.l.bf16 %v324
        %s341 = smul.u32 %s32, 128
        %s342 = sld [smem:[#allocation2 + %s341]]
        %v343 = vstv %s342
        %v344 = vmul.f32 %v343, %v325
        %v345 = vmul.f32 %v343, %v326
        %v346 = vmul.f32 %v343, %v327
        %v347 = vmul.f32 %v343, %v328
        %v348 = vmul.f32 %v343, %v329
        %v349 = vmul.f32 %v343, %v330
        %v350 = vmul.f32 %v343, %v331
        %v351 = vmul.f32 %v343, %v332
        %v352 = vmul.f32 %v343, %v333
        %v353 = vmul.f32 %v343, %v334
        %v354 = vmul.f32 %v343, %v335
        %v355 = vmul.f32 %v343, %v336
        %v356 = vmul.f32 %v343, %v337
        %v357 = vmul.f32 %v343, %v338
        %v358 = vmul.f32 %v343, %v339
        %v359 = vmul.f32 %v343, %v340
        %s360 = sld [smem:[#allocation6 + %s341]]
        %v361 = vstv %s360
        %v362 = vmul.f32 %v361, %v325
        %v363 = vmul.f32 %v361, %v326
        %v364 = vmul.f32 %v361, %v327
        %v365 = vmul.f32 %v361, %v328
        %v366 = vmul.f32 %v361, %v329
        %v367 = vmul.f32 %v361, %v330
        %v368 = vmul.f32 %v361, %v331
        %v369 = vmul.f32 %v361, %v332
        %v370 = vmul.f32 %v361, %v333
        %v371 = vmul.f32 %v361, %v334
        %v372 = vmul.f32 %v361, %v335
        %v373 = vmul.f32 %v361, %v336
        %v374 = vmul.f32 %v361, %v337
        %v375 = vmul.f32 %v361, %v338
        %v376 = vmul.f32 %v361, %v339
        %v377 = vmul.f32 %v361, %v340
        %s378 = scalar_lea.vmem %s275, 64 [#allocation8]
        %v379 = vld [vmem:[%s378] sm:$0xf]
        %v380 = vld [vmem:[%s378 + $0x4] sm:$0xf]
        %v381 = vld [vmem:[%s378 + $0x8] sm:$0xf]
        %v382 = vld [vmem:[%s378 + $0xc] sm:$0xf]
        %v383 = vld [vmem:[%s378 + $0x10] sm:$0xf]
        %v384 = vld [vmem:[%s378 + $0x14] sm:$0xf]
        %v385 = vld [vmem:[%s378 + $0x18] sm:$0xf]
        %v386 = vld [vmem:[%s378 + $0x1c] sm:$0xf]
        %v387 = vld [vmem:[%s378 + $0x20] sm:$0xf]
        %v388 = vld [vmem:[%s378 + $0x24] sm:$0xf]
        %v389 = vld [vmem:[%s378 + $0x28] sm:$0xf]
        %v390 = vld [vmem:[%s378 + $0x2c] sm:$0xf]
        %v391 = vld [vmem:[%s378 + $0x30] sm:$0xf]
        %v392 = vld [vmem:[%s378 + $0x34] sm:$0xf]
        %v393 = vld [vmem:[%s378 + $0x38] sm:$0xf]
        %v394 = vld [vmem:[%s378 + $0x3c] sm:$0xf]
        %v395 = vunpack.c.l.bf16 %v379
        %v396 = vunpack.c.l.bf16 %v380
        %v397 = vunpack.c.l.bf16 %v381
        %v398 = vunpack.c.l.bf16 %v382
        %v399 = vunpack.c.l.bf16 %v383
        %v400 = vunpack.c.l.bf16 %v384
        %v401 = vunpack.c.l.bf16 %v385
        %v402 = vunpack.c.l.bf16 %v386
        %v403 = vunpack.c.l.bf16 %v387
        %v404 = vunpack.c.l.bf16 %v388
        %v405 = vunpack.c.l.bf16 %v389
        %v406 = vunpack.c.l.bf16 %v390
        %v407 = vunpack.c.l.bf16 %v391
        %v408 = vunpack.c.l.bf16 %v392
        %v409 = vunpack.c.l.bf16 %v393
        %v410 = vunpack.c.l.bf16 %v394
        %s411 = sadd.s32 %s341, 1
        %s412 = sld [smem:[#allocation2 + %s411]]
        %v413 = vstv %s412
        %v414 = vmul.f32 %v413, %v395
        %v415 = vmul.f32 %v413, %v396
        %v416 = vmul.f32 %v413, %v397
        %v417 = vmul.f32 %v413, %v398
        %v418 = vmul.f32 %v413, %v399
        %v419 = vmul.f32 %v413, %v400
        %v420 = vmul.f32 %v413, %v401
        %v421 = vmul.f32 %v413, %v402
        %v422 = vmul.f32 %v413, %v403
        %v423 = vmul.f32 %v413, %v404
        %v424 = vmul.f32 %v413, %v405
        %v425 = vmul.f32 %v413, %v406
        %v426 = vmul.f32 %v413, %v407
        %v427 = vmul.f32 %v413, %v408
        %v428 = vmul.f32 %v413, %v409
        %v429 = vmul.f32 %v413, %v410
        %v430 = vadd.f32 %v344, %v414
        %v431 = vadd.f32 %v345, %v415
        %v432 = vadd.f32 %v346, %v416
        %v433 = vadd.f32 %v347, %v417
        %v434 = vadd.f32 %v348, %v418
        %v435 = vadd.f32 %v349, %v419
        %v436 = vadd.f32 %v350, %v420
        %v437 = vadd.f32 %v351, %v421
        %v438 = vadd.f32 %v352, %v422
        %v439 = vadd.f32 %v353, %v423
        %v440 = vadd.f32 %v354, %v424
        %v441 = vadd.f32 %v355, %v425
        %v442 = vadd.f32 %v356, %v426
        %v443 = vadd.f32 %v357, %v427
        %v444 = vadd.f32 %v358, %v428
        %v445 = vadd.f32 %v359, %v429
        %s446 = sld [smem:[#allocation6 + %s411]]
        %v447 = vstv %s446
        %v448 = vmul.f32 %v447, %v395
        %v449 = vmul.f32 %v447, %v396
        %v450 = vmul.f32 %v447, %v397
        %v451 = vmul.f32 %v447, %v398
        %v452 = vmul.f32 %v447, %v399
        %v453 = vmul.f32 %v447, %v400
        %v454 = vmul.f32 %v447, %v401
        %v455 = vmul.f32 %v447, %v402
        %v456 = vmul.f32 %v447, %v403
        %v457 = vmul.f32 %v447, %v404
        %v458 = vmul.f32 %v447, %v405
        %v459 = vmul.f32 %v447, %v406
        %v460 = vmul.f32 %v447, %v407
        %v461 = vmul.f32 %v447, %v408
        %v462 = vmul.f32 %v447, %v409
        %v463 = vmul.f32 %v447, %v410
        %v464 = vadd.f32 %v362, %v448
        %v465 = vadd.f32 %v363, %v449
        %v466 = vadd.f32 %v364, %v450
        %v467 = vadd.f32 %v365, %v451
        %v468 = vadd.f32 %v366, %v452
        %v469 = vadd.f32 %v367, %v453
        %v470 = vadd.f32 %v368, %v454
        %v471 = vadd.f32 %v369, %v455
        %v472 = vadd.f32 %v370, %v456
        %v473 = vadd.f32 %v371, %v457
        %v474 = vadd.f32 %v372, %v458
        %v475 = vadd.f32 %v373, %v459
        %v476 = vadd.f32 %v374, %v460
        %v477 = vadd.f32 %v375, %v461
        %v478 = vadd.f32 %v376, %v462
        %v479 = vadd.f32 %v377, %v463
        %s480 = scalar_lea.vmem %s275, 128 [#allocation8]
        %v481 = vld [vmem:[%s480] sm:$0xf]
        %v482 = vld [vmem:[%s480 + $0x4] sm:$0xf]
        %v483 = vld [vmem:[%s480 + $0x8] sm:$0xf]
        %v484 = vld [vmem:[%s480 + $0xc] sm:$0xf]
        %v485 = vld [vmem:[%s480 + $0x10] sm:$0xf]
        %v486 = vld [vmem:[%s480 + $0x14] sm:$0xf]
        %v487 = vld [vmem:[%s480 + $0x18] sm:$0xf]
        %v488 = vld [vmem:[%s480 + $0x1c] sm:$0xf]
        %v489 = vld [vmem:[%s480 + $0x20] sm:$0xf]
        %v490 = vld [vmem:[%s480 + $0x24] sm:$0xf]
        %v491 = vld [vmem:[%s480 + $0x28] sm:$0xf]
        %v492 = vld [vmem:[%s480 + $0x2c] sm:$0xf]
        %v493 = vld [vmem:[%s480 + $0x30] sm:$0xf]
        %v494 = vld [vmem:[%s480 + $0x34] sm:$0xf]
        %v495 = vld [vmem:[%s480 + $0x38] sm:$0xf]
        %v496 = vld [vmem:[%s480 + $0x3c] sm:$0xf]
        %v497 = vunpack.c.l.bf16 %v481
        %v498 = vunpack.c.l.bf16 %v482
        %v499 = vunpack.c.l.bf16 %v483
        %v500 = vunpack.c.l.bf16 %v484
        %v501 = vunpack.c.l.bf16 %v485
        %v502 = vunpack.c.l.bf16 %v486
        %v503 = vunpack.c.l.bf16 %v487
        %v504 = vunpack.c.l.bf16 %v488
        %v505 = vunpack.c.l.bf16 %v489
        %v506 = vunpack.c.l.bf16 %v490
        %v507 = vunpack.c.l.bf16 %v491
        %v508 = vunpack.c.l.bf16 %v492
        %v509 = vunpack.c.l.bf16 %v493
        %v510 = vunpack.c.l.bf16 %v494
        %v511 = vunpack.c.l.bf16 %v495
        %v512 = vunpack.c.l.bf16 %v496
        %s513 = sadd.s32 %s341, 2
        %s514 = sld [smem:[#allocation2 + %s513]]
        %v515 = vstv %s514
        %v516 = vmul.f32 %v515, %v497
        %v517 = vmul.f32 %v515, %v498
        %v518 = vmul.f32 %v515, %v499
        %v519 = vmul.f32 %v515, %v500
        %v520 = vmul.f32 %v515, %v501
        %v521 = vmul.f32 %v515, %v502
        %v522 = vmul.f32 %v515, %v503
        %v523 = vmul.f32 %v515, %v504
        %v524 = vmul.f32 %v515, %v505
        %v525 = vmul.f32 %v515, %v506
        %v526 = vmul.f32 %v515, %v507
        %v527 = vmul.f32 %v515, %v508
        %v528 = vmul.f32 %v515, %v509
        %v529 = vmul.f32 %v515, %v510
        %v530 = vmul.f32 %v515, %v511
        %v531 = vmul.f32 %v515, %v512
        %v532 = vadd.f32 %v430, %v516
        %v533 = vadd.f32 %v431, %v517
        %v534 = vadd.f32 %v432, %v518
        %v535 = vadd.f32 %v433, %v519
        %v536 = vadd.f32 %v434, %v520
        %v537 = vadd.f32 %v435, %v521
        %v538 = vadd.f32 %v436, %v522
        %v539 = vadd.f32 %v437, %v523
        %v540 = vadd.f32 %v438, %v524
        %v541 = vadd.f32 %v439, %v525
        %v542 = vadd.f32 %v440, %v526
        %v543 = vadd.f32 %v441, %v527
        %v544 = vadd.f32 %v442, %v528
        %v545 = vadd.f32 %v443, %v529
        %v546 = vadd.f32 %v444, %v530
        %v547 = vadd.f32 %v445, %v531
        %s548 = sld [smem:[#allocation6 + %s513]]
        %v549 = vstv %s548
        %v550 = vmul.f32 %v549, %v497
        %v551 = vmul.f32 %v549, %v498
        %v552 = vmul.f32 %v549, %v499
        %v553 = vmul.f32 %v549, %v500
        %v554 = vmul.f32 %v549, %v501
        %v555 = vmul.f32 %v549, %v502
        %v556 = vmul.f32 %v549, %v503
        %v557 = vmul.f32 %v549, %v504
        %v558 = vmul.f32 %v549, %v505
        %v559 = vmul.f32 %v549, %v506
        %v560 = vmul.f32 %v549, %v507
        %v561 = vmul.f32 %v549, %v508
        %v562 = vmul.f32 %v549, %v509
        %v563 = vmul.f32 %v549, %v510
        %v564 = vmul.f32 %v549, %v511
        %v565 = vmul.f32 %v549, %v512
        %v566 = vadd.f32 %v464, %v550
        %v567 = vadd.f32 %v465, %v551
        %v568 = vadd.f32 %v466, %v552
        %v569 = vadd.f32 %v467, %v553
        %v570 = vadd.f32 %v468, %v554
        %v571 = vadd.f32 %v469, %v555
        %v572 = vadd.f32 %v470, %v556
        %v573 = vadd.f32 %v471, %v557
        %v574 = vadd.f32 %v472, %v558
        %v575 = vadd.f32 %v473, %v559
        %v576 = vadd.f32 %v474, %v560
        %v577 = vadd.f32 %v475, %v561
        %v578 = vadd.f32 %v476, %v562
        %v579 = vadd.f32 %v477, %v563
        %v580 = vadd.f32 %v478, %v564
        %v581 = vadd.f32 %v479, %v565
        %s582 = scalar_lea.vmem %s275, 192 [#allocation8]
        %v583 = vld [vmem:[%s582] sm:$0xf]
        %v584 = vld [vmem:[%s582 + $0x4] sm:$0xf]
        %v585 = vld [vmem:[%s582 + $0x8] sm:$0xf]
        %v586 = vld [vmem:[%s582 + $0xc] sm:$0xf]
        %v587 = vld [vmem:[%s582 + $0x10] sm:$0xf]
        %v588 = vld [vmem:[%s582 + $0x14] sm:$0xf]
        %v589 = vld [vmem:[%s582 + $0x18] sm:$0xf]
        %v590 = vld [vmem:[%s582 + $0x1c] sm:$0xf]
        %v591 = vld [vmem:[%s582 + $0x20] sm:$0xf]
        %v592 = vld [vmem:[%s582 + $0x24] sm:$0xf]
        %v593 = vld [vmem:[%s582 + $0x28] sm:$0xf]
        %v594 = vld [vmem:[%s582 + $0x2c] sm:$0xf]
        %v595 = vld [vmem:[%s582 + $0x30] sm:$0xf]
        %v596 = vld [vmem:[%s582 + $0x34] sm:$0xf]
        %v597 = vld [vmem:[%s582 + $0x38] sm:$0xf]
        %v598 = vld [vmem:[%s582 + $0x3c] sm:$0xf]
        %v599 = vunpack.c.l.bf16 %v583
        %v600 = vunpack.c.l.bf16 %v584
        %v601 = vunpack.c.l.bf16 %v585
        %v602 = vunpack.c.l.bf16 %v586
        %v603 = vunpack.c.l.bf16 %v587
        %v604 = vunpack.c.l.bf16 %v588
        %v605 = vunpack.c.l.bf16 %v589
        %v606 = vunpack.c.l.bf16 %v590
        %v607 = vunpack.c.l.bf16 %v591
        %v608 = vunpack.c.l.bf16 %v592
        %v609 = vunpack.c.l.bf16 %v593
        %v610 = vunpack.c.l.bf16 %v594
        %v611 = vunpack.c.l.bf16 %v595
        %v612 = vunpack.c.l.bf16 %v596
        %v613 = vunpack.c.l.bf16 %v597
        %v614 = vunpack.c.l.bf16 %v598
        %s615 = sadd.s32 %s341, 3
        %s616 = sld [smem:[#allocation2 + %s615]]
        %v617 = vstv %s616
        %v618 = vmul.f32 %v617, %v599
        %v619 = vmul.f32 %v617, %v600
        %v620 = vmul.f32 %v617, %v601
        %v621 = vmul.f32 %v617, %v602
        %v622 = vmul.f32 %v617, %v603
        %v623 = vmul.f32 %v617, %v604
        %v624 = vmul.f32 %v617, %v605
        %v625 = vmul.f32 %v617, %v606
        %v626 = vmul.f32 %v617, %v607
        %v627 = vmul.f32 %v617, %v608
        %v628 = vmul.f32 %v617, %v609
        %v629 = vmul.f32 %v617, %v610
        %v630 = vmul.f32 %v617, %v611
        %v631 = vmul.f32 %v617, %v612
        %v632 = vmul.f32 %v617, %v613
        %v633 = vmul.f32 %v617, %v614
        %v634 = vadd.f32 %v532, %v618
        %v635 = vadd.f32 %v533, %v619
        %v636 = vadd.f32 %v534, %v620
        %v637 = vadd.f32 %v535, %v621
        %v638 = vadd.f32 %v536, %v622
        %v639 = vadd.f32 %v537, %v623
        %v640 = vadd.f32 %v538, %v624
        %v641 = vadd.f32 %v539, %v625
        %v642 = vadd.f32 %v540, %v626
        %v643 = vadd.f32 %v541, %v627
        %v644 = vadd.f32 %v542, %v628
        %v645 = vadd.f32 %v543, %v629
        %v646 = vadd.f32 %v544, %v630
        %v647 = vadd.f32 %v545, %v631
        %v648 = vadd.f32 %v546, %v632
        %v649 = vadd.f32 %v547, %v633
        %s650 = sld [smem:[#allocation6 + %s615]]
        %v651 = vstv %s650
        %v652 = vmul.f32 %v651, %v599
        %v653 = vmul.f32 %v651, %v600
        %v654 = vmul.f32 %v651, %v601
        %v655 = vmul.f32 %v651, %v602
        %v656 = vmul.f32 %v651, %v603
        %v657 = vmul.f32 %v651, %v604
        %v658 = vmul.f32 %v651, %v605
        %v659 = vmul.f32 %v651, %v606
        %v660 = vmul.f32 %v651, %v607
        %v661 = vmul.f32 %v651, %v608
        %v662 = vmul.f32 %v651, %v609
        %v663 = vmul.f32 %v651, %v610
        %v664 = vmul.f32 %v651, %v611
        %v665 = vmul.f32 %v651, %v612
        %v666 = vmul.f32 %v651, %v613
        %v667 = vmul.f32 %v651, %v614
        %v668 = vadd.f32 %v566, %v652
        %v669 = vadd.f32 %v567, %v653
        %v670 = vadd.f32 %v568, %v654
        %v671 = vadd.f32 %v569, %v655
        %v672 = vadd.f32 %v570, %v656
        %v673 = vadd.f32 %v571, %v657
        %v674 = vadd.f32 %v572, %v658
        %v675 = vadd.f32 %v573, %v659
        %v676 = vadd.f32 %v574, %v660
        %v677 = vadd.f32 %v575, %v661
        %v678 = vadd.f32 %v576, %v662
        %v679 = vadd.f32 %v577, %v663
        %v680 = vadd.f32 %v578, %v664
        %v681 = vadd.f32 %v579, %v665
        %v682 = vadd.f32 %v580, %v666
        %v683 = vadd.f32 %v581, %v667
        %v684 = vpack.c.bf16 %v635, %v634
        %v685 = vpack.c.bf16 %v637, %v636
        %v686 = vpack.c.bf16 %v639, %v638
        %v687 = vpack.c.bf16 %v641, %v640
        %v688 = vpack.c.bf16 %v643, %v642
        %v689 = vpack.c.bf16 %v645, %v644
        %v690 = vpack.c.bf16 %v647, %v646
        %v691 = vpack.c.bf16 %v649, %v648
        %v700 = vunpack.c.l.b16 %v684
        %v701 = vunpack.c.h.b16 %v684
        %v702 = vunpack.c.l.b16 %v685
        %v703 = vunpack.c.h.b16 %v685
        %v704 = vunpack.c.l.b16 %v686
        %v705 = vunpack.c.h.b16 %v686
        %v706 = vunpack.c.l.b16 %v687
        %v707 = vunpack.c.h.b16 %v687
        %v708 = vunpack.c.l.b16 %v688
        %v709 = vunpack.c.h.b16 %v688
        %v710 = vunpack.c.l.b16 %v689
        %v711 = vunpack.c.h.b16 %v689
        %v712 = vunpack.c.l.b16 %v690
        %v713 = vunpack.c.h.b16 %v690
        %v714 = vunpack.c.l.b16 %v691
        %v715 = vunpack.c.h.b16 %v691
        %v716 = vpack.c.b16 %v700, %v700
        %v717 = vpack.c.b16 %v701, %v701
        %v718 = vpack.c.b16 %v702, %v702
        %v719 = vpack.c.b16 %v703, %v703
        %v720 = vpack.c.b16 %v704, %v704
        %v721 = vpack.c.b16 %v705, %v705
        %v722 = vpack.c.b16 %v706, %v706
        %v723 = vpack.c.b16 %v707, %v707
        %v724 = vpack.c.b16 %v708, %v708
        %v725 = vpack.c.b16 %v709, %v709
        %v726 = vpack.c.b16 %v710, %v710
        %v727 = vpack.c.b16 %v711, %v711
        %v728 = vpack.c.b16 %v712, %v712
        %v729 = vpack.c.b16 %v713, %v713
        %v730 = vpack.c.b16 %v714, %v714
        %v731 = vpack.c.b16 %v715, %v715
        %748 = vst [vmem:[%s298] sm:$0xf] %v716
        %749 = vst [vmem:[%s298 + $0x4] sm:$0xf] %v717
        %750 = vst [vmem:[%s298 + $0x8] sm:$0xf] %v718
        %751 = vst [vmem:[%s298 + $0xc] sm:$0xf] %v719
        %752 = vst [vmem:[%s298 + $0x10] sm:$0xf] %v720
        %753 = vst [vmem:[%s298 + $0x14] sm:$0xf] %v721
        %754 = vst [vmem:[%s298 + $0x18] sm:$0xf] %v722
        %755 = vst [vmem:[%s298 + $0x1c] sm:$0xf] %v723
        %756 = vst [vmem:[%s298 + $0x20] sm:$0xf] %v724
        %757 = vst [vmem:[%s298 + $0x24] sm:$0xf] %v725
        %758 = vst [vmem:[%s298 + $0x28] sm:$0xf] %v726
        %759 = vst [vmem:[%s298 + $0x2c] sm:$0xf] %v727
        %760 = vst [vmem:[%s298 + $0x30] sm:$0xf] %v728
        %761 = vst [vmem:[%s298 + $0x34] sm:$0xf] %v729
        %762 = vst [vmem:[%s298 + $0x38] sm:$0xf] %v730
        %763 = vst [vmem:[%s298 + $0x3c] sm:$0xf] %v731
        %v764 = vpack.c.bf16 %v669, %v668
        %v765 = vpack.c.bf16 %v671, %v670
        %v766 = vpack.c.bf16 %v673, %v672
        %v767 = vpack.c.bf16 %v675, %v674
        %v768 = vpack.c.bf16 %v677, %v676
        %v769 = vpack.c.bf16 %v679, %v678
        %v770 = vpack.c.bf16 %v681, %v680
        %v771 = vpack.c.bf16 %v683, %v682
        %v780 = vunpack.c.l.b16 %v764
        %v781 = vunpack.c.h.b16 %v764
        %v782 = vunpack.c.l.b16 %v765
        %v783 = vunpack.c.h.b16 %v765
        %v784 = vunpack.c.l.b16 %v766
        %v785 = vunpack.c.h.b16 %v766
        %v786 = vunpack.c.l.b16 %v767
        %v787 = vunpack.c.h.b16 %v767
        %v788 = vunpack.c.l.b16 %v768
        %v789 = vunpack.c.h.b16 %v768
        %v790 = vunpack.c.l.b16 %v769
        %v791 = vunpack.c.h.b16 %v769
        %v792 = vunpack.c.l.b16 %v770
        %v793 = vunpack.c.h.b16 %v770
        %v794 = vunpack.c.l.b16 %v771
        %v795 = vunpack.c.h.b16 %v771
        %v796 = vpack.c.b16 %v780, %v780
        %v797 = vpack.c.b16 %v781, %v781
        %v798 = vpack.c.b16 %v782, %v782
        %v799 = vpack.c.b16 %v783, %v783
        %v800 = vpack.c.b16 %v784, %v784
        %v801 = vpack.c.b16 %v785, %v785
        %v802 = vpack.c.b16 %v786, %v786
        %v803 = vpack.c.b16 %v787, %v787
        %v804 = vpack.c.b16 %v788, %v788
        %v805 = vpack.c.b16 %v789, %v789
        %v806 = vpack.c.b16 %v790, %v790
        %v807 = vpack.c.b16 %v791, %v791
        %v808 = vpack.c.b16 %v792, %v792
        %v809 = vpack.c.b16 %v793, %v793
        %v810 = vpack.c.b16 %v794, %v794
        %v811 = vpack.c.b16 %v795, %v795
        %828 = vst [vmem:[%s305] sm:$0xf] %v796
        %829 = vst [vmem:[%s305 + $0x4] sm:$0xf] %v797
        %830 = vst [vmem:[%s305 + $0x8] sm:$0xf] %v798
        %831 = vst [vmem:[%s305 + $0xc] sm:$0xf] %v799
        %832 = vst [vmem:[%s305 + $0x10] sm:$0xf] %v800
        %833 = vst [vmem:[%s305 + $0x14] sm:$0xf] %v801
        %834 = vst [vmem:[%s305 + $0x18] sm:$0xf] %v802
        %835 = vst [vmem:[%s305 + $0x1c] sm:$0xf] %v803
        %836 = vst [vmem:[%s305 + $0x20] sm:$0xf] %v804
        %837 = vst [vmem:[%s305 + $0x24] sm:$0xf] %v805
        %838 = vst [vmem:[%s305 + $0x28] sm:$0xf] %v806
        %839 = vst [vmem:[%s305 + $0x2c] sm:$0xf] %v807
        %840 = vst [vmem:[%s305 + $0x30] sm:$0xf] %v808
        %841 = vst [vmem:[%s305 + $0x34] sm:$0xf] %v809
        %842 = vst [vmem:[%s305 + $0x38] sm:$0xf] %v810
        %843 = vst [vmem:[%s305 + $0x3c] sm:$0xf] %v811
        %s844 = sand.u32 %s128, 1
        %s845 = scalar_lea.sflag [#allocation4], %s844
        %s846 = sand.u32 %s128, 1
        %s847 = smul.addr %s846, 64
        %s848 = scalar_lea.vmem [#allocation9], %s847
        %s849 = sand.u32 %s158, 1
        %s850 = scalar_lea.sflag [#allocation11], %s849
        %s851 = sand.u32 %s158, 1
        %s852 = smul.addr %s851, 64
        %s853 = scalar_lea.vmem [#allocation10], %s852
        // Predicated region
        $region45: #{tpu_custom_call.1} parent=31 // pred_check
          %p854 = pneg %p138
        $region46: #{tpu_custom_call.1} parent=31 // pred_check_branch
          %856 = sbr.rel (%p854) target = $region48
        $region47: #{tpu_custom_call.1} parent=31 // pred_region
          %s857 = smul.u32 16, %s33
          %s859 = ssub.s32 1024, 1024
          %860 = vsyncadd %s845, %s859
          %s861 = smul.addr %s857, 3
          %s862 = sadd.s32 %s34, %s861
          %s863 = smul.addr %s32, 144
          %s864 = sadd.s32 %s862, %s863
          %s865 = smul.addr %s864, 64
          %s866 = scalar_lea.hbm %s3, %s865
          %s867 = sshll.u32 %s848, 4
          %s868 = int_to_ptr.vmem [resolvable:$true] %s867
          %873 = dma.vmem_to_hbm [thread:$0]  %s868, 1024, %s866, %s845, 64, 192, 4
        $region48: #{tpu_custom_call.1} parent=31 // pred_fallthru
          _
        // Predicated region
        $region49: #{tpu_custom_call.1} parent=31 // pred_check
          %p874 = pneg %p168
        $region50: #{tpu_custom_call.1} parent=31 // pred_check_branch
          %876 = sbr.rel (%p874) target = $region52
        $region51: #{tpu_custom_call.1} parent=31 // pred_region
          %s877 = smul.u32 16, %s33
          %s879 = ssub.s32 1024, 1024
          %880 = vsyncadd %s850, %s879
          %s881 = smul.addr %s877, 3
          %s882 = sadd.s32 %s34, %s881
          %s883 = smul.addr %s32, 144
          %s884 = sadd.s32 %s882, %s883
          %s885 = smul.addr %s884, 64
          %s886 = scalar_lea.hbm %s4, %s885
          %s887 = sshll.u32 %s853, 4
          %s888 = int_to_ptr.vmem [resolvable:$true] %s887
          %893 = dma.vmem_to_hbm [thread:$0]  %s888, 1024, %s886, %s850, 64, 192, 4
        $region52: #{tpu_custom_call.1} parent=31 // pred_fallthru
          _
      $region32: #{tpu_custom_call.1} parent=5 // pred_fallthru
        _
      %p894 = scmp.le.s32.totalorder 2, %s22
      // Predicated region
      $region53: #{tpu_custom_call.1} parent=5 // pred_check
        %p895 = pneg %p894
      $region54: #{tpu_custom_call.1} parent=5 // pred_check_branch
        %897 = sbr.rel (%p895) target = $region56
      $region55: #{tpu_custom_call.1} parent=5 // pred_region
        %s898 = ssub.s32 %s22, 2
        // Predicated region
        $region57: #{tpu_custom_call.1} parent=55 // pred_check
          %p899 = pneg %p144
        $region58: #{tpu_custom_call.1} parent=55 // pred_check_branch
          %901 = sbr.rel (%p899) target = $region60
        $region59: #{tpu_custom_call.1} parent=55 // pred_region
          %s902 = sand.u32 %s129, 1
          %s903 = scalar_lea.sflag [#allocation4], %s902
          %s904 = sand.u32 %s129, 1
          %s905 = smul.addr %s904, 64
          %s906 = scalar_lea.vmem [#allocation9], %s905
          %907 = dma.done %s903, 1024
        $region60: #{tpu_custom_call.1} parent=55 // pred_fallthru
          _
        // Predicated region
        $region61: #{tpu_custom_call.1} parent=55 // pred_check
          %p908 = pneg %p174
        $region62: #{tpu_custom_call.1} parent=55 // pred_check_branch
          %910 = sbr.rel (%p908) target = $region64
        $region63: #{tpu_custom_call.1} parent=55 // pred_region
          %s911 = sand.u32 %s159, 1
          %s912 = scalar_lea.sflag [#allocation11], %s911
          %s913 = sand.u32 %s159, 1
          %s914 = smul.addr %s913, 64
          %s915 = scalar_lea.vmem [#allocation10], %s914
          %916 = dma.done %s912, 1024
        $region64: #{tpu_custom_call.1} parent=55 // pred_fallthru
          _
      $region56: #{tpu_custom_call.1} parent=5 // pred_fallthru
        _
    $region6: #{tpu_custom_call.1} parent=1 // loop_footer
      %s26 = sadd.s32 1, %s22
    $region7: #{tpu_custom_call.1} parent=1 // loop_footer_branch
      %21 = sbr.rel target = $region3
    $region8: #{tpu_custom_call.1} parent=1 // loop_exit
      _
    %917 = vsyncpa [#allocation3], 1
    %s918 = scalar_lea.sflag [#allocation3], 1
    %919 = vsyncpa %s918, 1
    %920 = vsyncpa [#allocation4], 1
    %s921 = scalar_lea.sflag [#allocation4], 1
    %922 = vsyncpa %s921, 1
    %923 = vsyncpa [#allocation11], 1
    %s924 = scalar_lea.sflag [#allocation11], 1
    %925 = vsyncpa %s924, 1
    %926 = vsyncpa [#allocation5], 1
    %s927 = scalar_lea.sflag [#allocation5], 1
    %928 = vsyncpa %s927, 1
    %929 = vsyncpa [#allocation7], 1

</llo_original>
